<compile_context>
chip_gen: v7x
topology: tpu7x:2x2x1
jax: 0.10.0
libtpu: 0.0.40
codegen_flags: <defaults>
</compile_context>

<pallas_src>
import functools

import jax
import jax.numpy as jnp
from jax import lax
from jax.experimental import pallas as pl
from jax.experimental.pallas import tpu as pltpu

CLIP_EPS = 0.2
KL_WEIGHT = 0.05
MAX_LEN = 8        # action_length used by the loss (see module __init__)

TB_CAP = 256       # batch-tile cap (multiple of 8 and 16 -> legal f32/bf16)
TS_CAP = 2048      # seq-tile cap   (multiple of 128)


def _policy_loss_kernel(*refs, clip_eps, kl_weight, use_kl, b, s, tb, ts,
                        mask_rows, mask_cols):
    if use_kl:
        lp_ref, olp_ref, rlp_ref, adv_ref, out_ref = refs
    else:
        lp_ref, olp_ref, adv_ref, out_ref = refs
        rlp_ref = None

    # Per-batch-tile resident accumulator: init at the first seq step.
    @pl.when(pl.program_id(1) == 0)
    def _():
        out_ref[...] = jnp.zeros_like(out_ref)

    lp = lp_ref[...].astype(jnp.float32)     # [TB, TS]
    olp = olp_ref[...].astype(jnp.float32)   # [TB, TS]
    adv = adv_ref[...].astype(jnp.float32)   # [TB, 1] -> lane-broadcast in mul

    ratio = jnp.exp(lp - olp)
    surr1 = ratio * adv
    surr2 = jnp.clip(ratio, 1.0 - clip_eps, 1.0 + clip_eps) * adv
    loss = -jnp.minimum(surr1, surr2)

    if use_kl:
        rlp = rlp_ref[...].astype(jnp.float32)  # [TB, TS]
        log_ratio = rlp - lp
        loss = loss + kl_weight * (jnp.exp(log_ratio) - log_ratio - 1.0)

    # Mask ragged trailing tiles: with no wrapper-side padding, out-of-bounds
    # elements of a partial block are unspecified and MUST contribute 0.
    # Only emitted when the grid actually has a ragged edge (static check).
    if mask_rows or mask_cols:
        valid = None
        if mask_rows:
            rows = (lax.broadcasted_iota(jnp.int32, loss.shape, 0)
                    + pl.program_id(0) * tb)
            valid = rows < b
        if mask_cols:
            cols = (lax.broadcasted_iota(jnp.int32, loss.shape, 1)
                    + pl.program_id(1) * ts)
            cmask = cols < s
            valid = cmask if valid is None else jnp.logical_and(valid, cmask)
        loss = jnp.where(valid, loss, 0.0)

    if tb % 8 == 0 and ts % 128 == 0:
        # Fast path: fold the tile's (8,128) vreg blocks with pure VPU adds
        # into the vreg-shaped accumulator block (no per-step XLU reduce).
        acc = None
        for r0 in range(0, tb, 8):
            for c0 in range(0, ts, 128):
                blk = loss[r0:r0 + 8, c0:c0 + 128]
                acc = blk if acc is None else acc + blk
        out_ref[...] += acc[None, :, :]
    else:
        # Small / unaligned single-tile shapes: scalar sum deposited in
        # lane (0, 0) of the accumulator block (perf-irrelevant path).
        total = jnp.sum(loss)
        r_id = lax.broadcasted_iota(jnp.int32, (1, 8, 128), 1)
        c_id = lax.broadcasted_iota(jnp.int32, (1, 8, 128), 2)
        out_ref[...] += jnp.where((r_id == 0) & (c_id == 0), total, 0.0)


def policy_loss(log_probs, old_log_probs, advantages, ref_log_probs=None,
                *, clip_eps=CLIP_EPS, kl_weight=KL_WEIGHT, max_len=MAX_LEN):
    """Scalar loss matching PolicyLoss.forward (action_mask=None)."""
    B, S = log_probs.shape
    use_kl = ref_log_probs is not None

    # A dim that fits in one tile uses the full dim (always layout-legal and
    # avoids any over-hanging block); larger dims use aligned capped tiles
    # with in-kernel masking of the ragged trailing tile.
    TB = B if B <= TB_CAP else TB_CAP
    TS = S if S <= TS_CAP else TS_CAP
    nb = pl.cdiv(B, TB)
    ns = pl.cdiv(S, TS)
    mask_rows = (B % TB) != 0
    mask_cols = (S % TS) != 0

    if advantages.ndim == 1:
        advantages = advantages[:, None]           # [B, 1]
    advantages = advantages.astype(jnp.float32)

    seq_spec = pl.BlockSpec((TB, TS), lambda i, j: (i, j))
    adv_spec = pl.BlockSpec((TB, 1), lambda i, j: (i, 0))
    # Per-batch-tile vreg-shaped partials; resident across the seq axis.
    out_spec = pl.BlockSpec((1, 8, 128), lambda i, j: (i, 0, 0))

    inputs = [log_probs, old_log_probs]
    in_specs = [seq_spec, seq_spec]
    if use_kl:
        inputs.append(ref_log_probs)
        in_specs.append(seq_spec)
    inputs.append(advantages)
    in_specs.append(adv_spec)

    kernel = functools.partial(
        _policy_loss_kernel,
        clip_eps=float(clip_eps),
        kl_weight=float(kl_weight),
        use_kl=use_kl,
        b=B, s=S, tb=TB, ts=TS,
        mask_rows=mask_rows, mask_cols=mask_cols,
    )

    partials = pl.pallas_call(
        kernel,
        out_shape=jax.ShapeDtypeStruct((nb, 8, 128), jnp.float32),
        grid_spec=pltpu.PrefetchScalarGridSpec(
            num_scalar_prefetch=0,
            grid=(nb, ns),
            in_specs=in_specs,
            out_specs=out_spec,
        ),
        compiler_params=pltpu.CompilerParams(
            # Batch tiles are independent (own output block) -> parallel
            # (splits across v7x's 2 TensorCores); seq axis accumulates.
            dimension_semantics=("parallel", "arbitrary"),
            vmem_limit_bytes=48 * 1024 * 1024,
        ),
    )(*inputs)

    total = jnp.sum(partials)
    # sum(loss) / (max_len + 0.001) per row, then mean over B, folded into one
    # constant applied once.
    return total / (jnp.float32(B) * (float(max_len) + 0.001))


def _reference(log_probs, old_log_probs, advantages, ref_log_probs,
               clip_eps=CLIP_EPS, kl_weight=KL_WEIGHT, max_len=MAX_LEN):
    adv = advantages[:, None]
    ratio = jnp.exp(log_probs - old_log_probs)
    surr1 = ratio * adv
    surr2 = jnp.clip(ratio, 1 - clip_eps, 1 + clip_eps) * adv
    loss = -jnp.minimum(surr1, surr2)
    if ref_log_probs is not None:
        lr = ref_log_probs - log_probs
        loss = loss + kl_weight * (jnp.exp(lr) - lr - 1.0)
    return jnp.mean(jnp.sum(loss, axis=1) / (max_len + 0.001))


if __name__ == "__main__":
    key = jax.random.PRNGKey(0)
    k1, k2, k3, k4 = jax.random.split(key, 4)

    def make_inputs(b, s, dtype=jnp.float32):
        lp = -jax.random.uniform(k1, (b, s), jnp.float32, 0.1, 2.0)
        olp = -jax.random.uniform(k2, (b, s), jnp.float32, 0.1, 2.0)
        rlp = -jax.random.uniform(k3, (b, s), jnp.float32, 0.1, 2.0)
        adv = jax.random.normal(k4, (b,), jnp.float32)
        return lp.astype(dtype), olp.astype(dtype), rlp.astype(dtype), adv

    def check(b, s, use_kl, dtype=jnp.float32, rtol=1e-5, atol=1e-5):
        lp, olp, rlp, adv = make_inputs(b, s, dtype)
        out = jax.block_until_ready(
            policy_loss(lp, olp, adv, rlp if use_kl else None))
        ref = _reference(lp.astype(jnp.float32), olp.astype(jnp.float32), adv,
                         rlp.astype(jnp.float32) if use_kl else None)
        assert jnp.allclose(out, ref, rtol=rtol, atol=atol), (
            b, s, use_kl, dtype, out, ref)

    # Module-spec small shapes (B=2, seq=8): single full-dim tile path.
    check(2, 8, use_kl=True)                    # PPO + KL (4-input kernel)
    check(2, 8, use_kl=False)                   # PPO only (3-input kernel)
    # Seq-tiled path: ragged trailing column tile -> in-kernel masking.
    check(4, 2500, use_kl=True, rtol=1e-3, atol=1e-3)
    # Batch-tiled path: two partial output blocks ("parallel" axis),
    # ragged trailing row tile, fast vreg-fold reduction.
    check(300, 256, use_kl=True, rtol=1e-3, atol=1e-3)
    # bf16 streamed inputs (kernel upcasts per tile; halves HBM traffic).
    check(2, 8, use_kl=True, dtype=jnp.bfloat16, rtol=1e-4, atol=1e-4)

    print("KERNEL_OK")
</pallas_src>

<mosaic_0001>
module attributes {stable_mosaic.version = 11 : i64} {
  func.func @_policy_loss_kernel(%arg0: i32, %arg1: i32, %arg2: memref<2x8xf32, #tpu.memory_space<vmem>>, %arg3: memref<2x8xf32, #tpu.memory_space<vmem>>, %arg4: memref<2x8xf32, #tpu.memory_space<vmem>>, %arg5: memref<2x1xf32, #tpu.memory_space<vmem>>, %arg6: memref<1x8x128xf32, #tpu.memory_space<vmem>>) attributes {dimension_semantics = [#tpu.dimension_semantics<parallel>, #tpu.dimension_semantics<arbitrary>], iteration_bounds = array<i64: 1, 1>, scalar_prefetch = 0 : i64, scratch_operands = 0 : i64, tpu.core_type = #tpu.core_type<tc>, window_params = [{transform_indices = @transform_0, window_bounds = array<i64: 2, 8>}, {transform_indices = @transform_1, window_bounds = array<i64: 2, 8>}, {transform_indices = @transform_2, window_bounds = array<i64: 2, 8>}, {transform_indices = @transform_3, window_bounds = array<i64: 2, 1>}, {transform_indices = @transform_4, window_bounds = array<i64: 1, 8, 128>}]} {
    %c0_i32 = arith.constant 0 : i32
    %0 = arith.cmpi eq, %arg1, %c0_i32 : i32
    %1 = arith.extui %0 : i1 to i32
    %c0_i32_0 = arith.constant 0 : i32
    %2 = arith.cmpi ne, %1, %c0_i32_0 : i32
    scf.if %2 {
      %cst_22 = arith.constant 0.000000e+00 : f32
      %45 = vector.broadcast %cst_22 : f32 to vector<1x8x128xf32>
      %c0_23 = arith.constant 0 : index
      %c0_24 = arith.constant 0 : index
      %c0_25 = arith.constant 0 : index
      %46 = vector.load %arg6[%c0_23, %c0_24, %c0_25] : memref<1x8x128xf32, #tpu.memory_space<vmem>>, vector<1x8x128xf32>
      tpu.vector_store %arg6[%c0_23, %c0_24, %c0_25], %45 {strides = array<i32>} : memref<1x8x128xf32, #tpu.memory_space<vmem>>, vector<1x8x128xf32>,
    } else {
    }
    %c0 = arith.constant 0 : index
    %c0_1 = arith.constant 0 : index
    %3 = vector.load %arg2[%c0, %c0_1] : memref<2x8xf32, #tpu.memory_space<vmem>>, vector<2x8xf32>
    %c0_2 = arith.constant 0 : index
    %c0_3 = arith.constant 0 : index
    %4 = vector.load %arg3[%c0_2, %c0_3] : memref<2x8xf32, #tpu.memory_space<vmem>>, vector<2x8xf32>
    %c0_4 = arith.constant 0 : index
    %c0_5 = arith.constant 0 : index
    %5 = vector.load %arg5[%c0_4, %c0_5] : memref<2x1xf32, #tpu.memory_space<vmem>>, vector<2x1xf32>
    %6 = arith.subf %3, %4 : vector<2x8xf32>
    %7 = math.exp %6 : vector<2x8xf32>
    %8 = vector.broadcast %5 : vector<2x1xf32> to vector<2x8xf32>
    %9 = arith.mulf %7, %8 : vector<2x8xf32>
    %cst = arith.constant 8.000000e-01 : f32
    %cst_6 = arith.constant 1.200000e+00 : f32
    %10 = vector.broadcast %cst : f32 to vector<2x8xf32>
    %11 = arith.maximumf %10, %7 : vector<2x8xf32>
    %12 = vector.broadcast %cst_6 : f32 to vector<2x8xf32>
    %13 = arith.minimumf %12, %11 : vector<2x8xf32>
    %14 = vector.broadcast %5 : vector<2x1xf32> to vector<2x8xf32>
    %15 = arith.mulf %13, %14 : vector<2x8xf32>
    %16 = arith.minimumf %9, %15 : vector<2x8xf32>
    %cst_7 = arith.constant 0.000000e+00 : f32
    %17 = vector.broadcast %cst_7 : f32 to vector<2x8xf32>
    %18 = arith.subf %17, %16 : vector<2x8xf32>
    %c0_8 = arith.constant 0 : index
    %c0_9 = arith.constant 0 : index
    %19 = vector.load %arg4[%c0_8, %c0_9] : memref<2x8xf32, #tpu.memory_space<vmem>>, vector<2x8xf32>
    %20 = arith.subf %19, %3 : vector<2x8xf32>
    %21 = math.exp %20 : vector<2x8xf32>
    %22 = arith.subf %21, %20 : vector<2x8xf32>
    %cst_10 = arith.constant 1.000000e+00 : f32
    %23 = vector.broadcast %cst_10 : f32 to vector<2x8xf32>
    %24 = arith.subf %22, %23 : vector<2x8xf32>
    %cst_11 = arith.constant 5.000000e-02 : f32
    %25 = vector.broadcast %cst_11 : f32 to vector<2x8xf32>
    %26 = arith.mulf %25, %24 : vector<2x8xf32>
    %27 = arith.addf %18, %26 : vector<2x8xf32>
    %28 = vector.shape_cast %27 : vector<2x8xf32> to vector<1x2x8xf32>
    %cst_12 = arith.constant dense<0.000000e+00> : vector<1xf32>
    %29 = vector.multi_reduction <add>, %28, %cst_12 [1, 2] : vector<1x2x8xf32> to vector<1xf32>
    %30 = vector.shape_cast %29 : vector<1xf32> to vector<1x1x1xf32>
    %31 = vector.extract %30[0, 0, 0] : f32 from vector<1x1x1xf32>
    %32 = tpu.iota {dimensions = array<i32: 1>} : vector<1x8x128xi32>
    %33 = tpu.iota {dimensions = array<i32: 2>} : vector<1x8x128xi32>
    %c0_13 = arith.constant 0 : index
    %c0_14 = arith.constant 0 : index
    %c0_15 = arith.constant 0 : index
    %34 = vector.load %arg6[%c0_13, %c0_14, %c0_15] : memref<1x8x128xf32, #tpu.memory_space<vmem>>, vector<1x8x128xf32>
    %c0_i32_16 = arith.constant 0 : i32
    %35 = vector.broadcast %c0_i32_16 : i32 to vector<1x8x128xi32>
    %36 = arith.cmpi eq, %32, %35 : vector<1x8x128xi32>
    %c0_i32_17 = arith.constant 0 : i32
    %37 = vector.broadcast %c0_i32_17 : i32 to vector<1x8x128xi32>
    %38 = arith.cmpi eq, %33, %37 : vector<1x8x128xi32>
    %39 = arith.andi %36, %38 : vector<1x8x128xi1>
    %cst_18 = arith.constant 0.000000e+00 : f32
    %40 = vector.broadcast %31 : f32 to vector<1x8x128xf32>
    %41 = vector.broadcast %cst_18 : f32 to vector<1x8x128xf32>
    %42 = arith.select %39, %40, %41 : vector<1x8x128xi1>, vector<1x8x128xf32>
    %43 = arith.addf %34, %42 : vector<1x8x128xf32>
    %c0_19 = arith.constant 0 : index
    %c0_20 = arith.constant 0 : index
    %c0_21 = arith.constant 0 : index
    %44 = vector.load %arg6[%c0_19, %c0_20, %c0_21] : memref<1x8x128xf32, #tpu.memory_space<vmem>>, vector<1x8x128xf32>
    tpu.vector_store %arg6[%c0_19, %c0_20, %c0_21], %43 {strides = array<i32>} : memref<1x8x128xf32, #tpu.memory_space<vmem>>, vector<1x8x128xf32>,
    return
  }
  func.func @transform_0(%arg0: i32, %arg1: i32) -> (i32, i32) {
    %c0_i32 = arith.constant 0 : i32
    return %arg0, %arg1 : i32, i32
  }
  func.func @transform_1(%arg0: i32, %arg1: i32) -> (i32, i32) {
    %c0_i32 = arith.constant 0 : i32
    return %arg0, %arg1 : i32, i32
  }
  func.func @transform_2(%arg0: i32, %arg1: i32) -> (i32, i32) {
    %c0_i32 = arith.constant 0 : i32
    return %arg0, %arg1 : i32, i32
  }
  func.func @transform_3(%arg0: i32, %arg1: i32) -> (i32, i32) {
    %c0_i32 = arith.constant 0 : i32
    %c0_i32_0 = arith.constant 0 : i32
    return %arg0, %c0_i32 : i32, i32
  }
  func.func @transform_4(%arg0: i32, %arg1: i32) -> (i32, i32, i32) {
    %c0_i32 = arith.constant 0 : i32
    %c0_i32_0 = arith.constant 0 : i32
    %c0_i32_1 = arith.constant 0 : i32
    return %arg0, %c0_i32, %c0_i32_0 : i32, i32, i32
  }
}

</mosaic_0001>

<llo_original>
// kernel: tpu_custom_call.1
$region0: #{tpu_custom_call.1}
  #allocation0 [shape = 'u32[]', space=smem, size = 0x4, offset = 0x4, fixed_abs, tag = 'smem constant byte address 0x4 - core index']
  #allocation1 [shape = 'u32[144,128]{1,0:T(1,128)}', space=vmem, size = 0x12000, scoped, tag = 'internal scratch']
  %s0 = inlined_call_operand.vmem [shape: f32[2,8], index: 0, kind: input, shape index: {}]
  %s1 = inlined_call_operand.vmem [shape: f32[2,8], index: 1, kind: input, shape index: {}]
  %s2 = inlined_call_operand.vmem [shape: f32[2,8], index: 2, kind: input, shape index: {}]
  %s3 = inlined_call_operand.vmem [shape: f32[2,1], index: 3, kind: input, shape index: {}]
  %s4 = inlined_call_operand.hbm [shape: f32[1,8,128], index: 4, kind: output, shape index: {}]
  %s5 = sld [smem:[#allocation0]]
  $region30: #{tpu_custom_call.1} parent=0
    _
  %s7 = ssub.s32 1, %s5
  %s8 = scalar_select 0, %s7, %s5
  $region1: #{tpu_custom_call.1} parent=0
    #allocation2 [shape = 'u8[4096]{0}', space=vmem, size = 0x1000, scoped, tag = 'output window, operand 0, single buffered']
    #allocation3 [shape = 's32[1]{0}', space=sflag, size = 0x4, scoped, tag = 'scoped memory for tpu_custom_call.1']
    %9 = vsyncpa [#allocation3], 0
    // Predicated region
    $region2: #{tpu_custom_call.1} parent=1 // pred_check
      _
    $region3: #{tpu_custom_call.1} parent=1 // pred_check_branch
      %11 = sbr.rel (0) target = $region5
    $region4: #{tpu_custom_call.1} parent=1 // pred_region
      _
    $region5: #{tpu_custom_call.1} parent=1 // pred_fallthru
      _
    // Predicated region
    $region6: #{tpu_custom_call.1} parent=1 // pred_check
      _
    $region7: #{tpu_custom_call.1} parent=1 // pred_check_branch
      %13 = sbr.rel (0) target = $region9
    $region8: #{tpu_custom_call.1} parent=1 // pred_region
      _
    $region9: #{tpu_custom_call.1} parent=1 // pred_fallthru
      _
    // Predicated region
    $region10: #{tpu_custom_call.1} parent=1 // pred_check
      _
    $region11: #{tpu_custom_call.1} parent=1 // pred_check_branch
      %15 = sbr.rel (0) target = $region13
    $region12: #{tpu_custom_call.1} parent=1 // pred_region
      _
    $region13: #{tpu_custom_call.1} parent=1 // pred_fallthru
      _
    // Predicated region
    $region14: #{tpu_custom_call.1} parent=1 // pred_check
      _
    $region15: #{tpu_custom_call.1} parent=1 // pred_check_branch
      %17 = sbr.rel (0) target = $region17
    $region16: #{tpu_custom_call.1} parent=1 // pred_region
      _
    $region17: #{tpu_custom_call.1} parent=1 // pred_fallthru
      _
    %p18 = scmp.eq.s32.totalorder 0, 0
    // Predicated region
    $region18: #{tpu_custom_call.1} parent=1 // pred_check
      %p19 = pneg %p18
    $region19: #{tpu_custom_call.1} parent=1 // pred_check_branch
      %21 = sbr.rel (%p19) target = $region21
    $region20: #{tpu_custom_call.1} parent=1 // pred_region
      %22 = vst [vmem:[#allocation2] sm:$0xff] 0.0
    $region21: #{tpu_custom_call.1} parent=1 // pred_fallthru
      _
    %v23 = vld [vmem:[%s0] sm:$0x3]
    %v24 = vld [vmem:[%s1] sm:$0x3]
    %v25 = vld [vmem:[%s3] sm:$0x3]
    %v26 = vsub.f32 %v23, %v24
    %v27 = vmul.f32 %v26, 1.442695
    %v28 = vpow.pop %v27
    %30 = vset.pattern.permute.xlu0 0
    %31 = vperm.xlu0 %30, %v25
    %v32 = vpop.permute.xlu0 %31
    %v34 = vmul.f32 %v28, %v32
    %v35 = vmax.f32 %v28, 0.8
    %v36 = vmin.f32 %v35, 1.2
    %v37 = vmul.f32 %v36, %v32
    %v38 = vmin.f32 %v34, %v37
    %v39 = vsub.f32 0.0, %v38
    %v40 = vld [vmem:[%s2] sm:$0x3]
    %v41 = vsub.f32 %v40, %v23
    %v42 = vmul.f32 %v41, 1.442695
    %v43 = vpow.pop %v42
    %v44 = vsub.f32 %v43, %v41
    %v45 = vsub.f32 %v44, 1.0
    %v46 = vmul.f32 %v45, 0.05
    %v47 = vadd.f32 %v39, %v46
    %vm48 = vcmask 58368
    %v49 = vsel %vm48, %v47, 0.0
    %50 = vadd.xlane.f32.xlu0 %v49
    %v51 = vpop.xlane.xlu0 %50
    %v52 = vrot.slane %v51, 4
    %v53 = vadd.f32 %v51, %v52
    %v54 = vrot.slane %v53, 2
    %v55 = vadd.f32 %v53, %v54
    %v56 = vrot.slane %v55, 1
    %v57 = vadd.f32 %v55, %v56
    %s58 = vtos %v57
    %v59 = vlaneseq
    %v60 = vshrl.u32 %v59, 7
    %v61 = vlaneseq
    %v62 = vand.u32 %v61, 127
    %v63 = vld [vmem:[#allocation2] sm:$0xff]
    %vm64 = vcmp.eq.s32.totalorder %v60, 0
    %vm65 = vcmp.eq.s32.totalorder %v62, 0
    %vm66 = vmand %vm64, %vm65
    %v67 = vstv %s58
    %v68 = vsel %vm66, %v67, 0.0
    %v69 = vadd.f32 %v63, %v68
    %70 = vst [vmem:[#allocation2] sm:$0xff] %v69
    // Predicated region
    $region22: #{tpu_custom_call.1} parent=1 // pred_check
      _
    $region23: #{tpu_custom_call.1} parent=1 // pred_check_branch
      %72 = sbr.rel (0) target = $region25
    $region24: #{tpu_custom_call.1} parent=1 // pred_region
      %s74 = ssub.s32 128, 128
      %75 = vsyncadd [#allocation3], %s74
      %s77 = sshll.u32 [#allocation2], 4
      %s78 = int_to_ptr.vmem [resolvable:$true] %s77
      %80 = dma.vmem_to_hbm [thread:$0]  %s78, 128, %s4, [#allocation3]
    $region25: #{tpu_custom_call.1} parent=1 // pred_fallthru
      _
    // Predicated region
    $region26: #{tpu_custom_call.1} parent=1 // pred_check
      _
    $region27: #{tpu_custom_call.1} parent=1 // pred_check_branch
      %82 = sbr.rel (0) target = $region29
    $region28: #{tpu_custom_call.1} parent=1 // pred_region
      %83 = dma.done [#allocation3], 128
    $region29: #{tpu_custom_call.1} parent=1 // pred_fallthru
      _
    %84 = vsyncpa [#allocation3], 1

</llo_original>
